<compile_context>
chip_gen: v7x
topology: tpu7x:2x2x1
jax: 0.10.0
libtpu: 0.0.40
codegen_flags: <defaults>
</compile_context>

<pallas_src>
import random

import numpy as np
import jax
import jax.numpy as jnp
from jax.experimental import pallas as pl
from jax.experimental.pallas import tpu as pltpu

LANE = 128


def _round_up(v, m):
    return ((v + m - 1) // m) * m


# ----------------------------- fused Pallas kernel -------------------------- #

def _hgi_fused_kernel(adj_ref, xb_ref, assign_ref, radj_ref, area_ref,
                      w_enc_ref, w_p2r_ref, w_r2c_ref,
                      pos_poi_ref, neg_poi_ref, region_ref, neg_region_ref,
                      city_ref):
    f32 = jnp.float32
    adj = adj_ref[...]                          # [N, N]      bf16
    xb = xb_ref[...]                            # [N, 2*Fp]   bf16 = [x | cor_x]
    cdt = adj.dtype                             # compute dtype (bf16)
    n = adj.shape[0]
    fp = w_enc_ref.shape[0]
    hp = w_enc_ref.shape[1]
    r = assign_ref.shape[0]

    # --- POI encoder: relu((A @ X) @ W_enc), pos+neg fused --------------------
    # One adj pass over the concatenated features, one w_enc pass over the
    # row-stacked activations.
    ax_both = jnp.dot(adj, xb, preferred_element_type=f32)            # [N, 2Fp]
    ax_stack = jnp.concatenate(
        [ax_both[:, :fp], ax_both[:, fp:]], axis=0).astype(cdt)       # [2N, Fp]
    poi_stack = jnp.maximum(
        jnp.dot(ax_stack, w_enc_ref[...], preferred_element_type=f32), 0.0)  # [2N, Hp]
    pos_poi = poi_stack[:n]                                           # [N, Hp] f32
    neg_poi = poi_stack[n:]                                           # [N, Hp] f32
    pos_poi_ref[...] = pos_poi.astype(pos_poi_ref.dtype)              # bf16 store
    neg_poi_ref[...] = neg_poi.astype(neg_poi_ref.dtype)              # bf16 store

    # --- poi2region: relu((A_region @ (M @ P)) @ W_p2r), pos+neg batched ------
    poi_h = jnp.concatenate([pos_poi, neg_poi], axis=1).astype(cdt)   # [N, 2Hp]
    pooled = jnp.dot(assign_ref[...], poi_h,
                     preferred_element_type=f32)                      # [R, 2Hp]
    msg = jnp.dot(radj_ref[...], pooled.astype(cdt),
                  preferred_element_type=f32)                         # [R, 2Hp]
    msg_stack = jnp.concatenate(
        [msg[:, :hp], msg[:, hp:]], axis=0).astype(cdt)               # [2R, Hp]
    region_stack = jnp.maximum(
        jnp.dot(msg_stack, w_p2r_ref[...], preferred_element_type=f32), 0.0)  # [2R, Hp]
    region = region_stack[:r]                                         # [R, Hp] f32
    neg_region = region_stack[r:]                                     # [R, Hp] f32
    region_ref[...] = region
    neg_region_ref[...] = neg_region

    # --- region2city epilogue: tanh((area . Remb) @ W_r2c) --------------------
    # Weighted row-sum on the VPU instead of a 1-row MXU matmul.
    agg = jnp.sum(area_ref[...] * region, axis=0, keepdims=True)      # [1, Hp] f32
    city = jnp.dot(agg.astype(cdt), w_r2c_ref[...],
                   preferred_element_type=f32)                        # [1, Hp]
    city_ref[...] = jnp.tanh(city)


# ------------------------------ device wrapper ------------------------------ #

@jax.jit
def _hgi_device_forward(x, adj, assign, region_adj, area_row,
                        w_enc, w_p2r, w_r2c, perm):
    N, F = x.shape
    H = w_enc.shape[1]
    R = assign.shape[0]
    Fp = _round_up(F, LANE)
    Hp = _round_up(H, LANE)

    bf16 = jnp.bfloat16
    # Lane-dense zero-padding of the feature / hidden dims; bf16 operand casts.
    x_p = jnp.pad(x, ((0, 0), (0, Fp - F)))                      # [N, Fp] f32
    cor_p = jnp.take(x_p, perm.astype(jnp.int32), axis=0)        # corruption gather
    xb = jnp.concatenate([x_p, cor_p], axis=-1).astype(bf16)     # [N, 2Fp]
    adj_b = adj.astype(bf16)
    assign_b = assign.astype(bf16)
    radj_b = region_adj.astype(bf16)
    # area broadcast to a lane-dense [R, Hp] f32 panel for the VPU weighted sum
    area_full = jnp.broadcast_to(jnp.transpose(area_row), (R, Hp)).astype(jnp.float32)
    w_enc_p = jnp.pad(w_enc, ((0, Fp - F), (0, Hp - H))).astype(bf16)
    w_p2r_p = jnp.pad(w_p2r, ((0, Hp - H), (0, Hp - H))).astype(bf16)
    w_r2c_p = jnp.pad(w_r2c, ((0, Hp - H), (0, Hp - H))).astype(bf16)

    # scoped-VMEM limit from the real footprint (with headroom, capped < physical)
    def _nbytes(shape, dtype):
        return int(np.prod(shape)) * jnp.dtype(dtype).itemsize

    io_bytes = (
        _nbytes((N, N), bf16) + _nbytes((N, 2 * Fp), bf16)
        + _nbytes((R, N), bf16) + _nbytes((R, R), bf16) + _nbytes((R, Hp), jnp.float32)
        + _nbytes((Fp, Hp), bf16) + 2 * _nbytes((Hp, Hp), bf16)
        + 2 * _nbytes((N, Hp), bf16) + 2 * _nbytes((R, Hp), jnp.float32)
        + _nbytes((1, Hp), jnp.float32)
        # rough bound on in-kernel f32 intermediates
        + _nbytes((2 * N, 2 * Fp), jnp.float32) + _nbytes((2 * N, 2 * Hp), jnp.float32)
    )
    try:
        phys_vmem = int(pltpu.get_tpu_info().vmem_capacity_bytes)
    except Exception:
        phys_vmem = 64 << 20
    vmem_limit = int(min(max(4 * io_bytes, 32 << 20), int(phys_vmem * 0.9)))

    vmem = pl.BlockSpec(memory_space=pltpu.MemorySpace.VMEM)
    pos_poi, neg_poi, region, neg_region, city = pl.pallas_call(
        _hgi_fused_kernel,
        out_shape=(
            jax.ShapeDtypeStruct((N, Hp), bf16),          # pos poi emb (bf16)
            jax.ShapeDtypeStruct((N, Hp), bf16),          # neg poi emb (bf16)
            jax.ShapeDtypeStruct((R, Hp), jnp.float32),   # region emb
            jax.ShapeDtypeStruct((R, Hp), jnp.float32),   # neg region emb
            jax.ShapeDtypeStruct((1, Hp), jnp.float32),   # city emb
        ),
        in_specs=[vmem] * 8,
        out_specs=(vmem,) * 5,
        compiler_params=pltpu.CompilerParams(vmem_limit_bytes=vmem_limit),
    )(adj_b, xb, assign_b, radj_b, area_full, w_enc_p, w_p2r_p, w_r2c_p)

    # NOTE: outputs stay lane-padded (Hp); strip only at the final consumer.
    return pos_poi, neg_poi, region, neg_region, city


# ------------------------------ HGI forward --------------------------------- #

def hgi_forward(params, data, perm_key, py_rng):
    """Reproduces HierarchicalGraphInfomax.forward semantics."""
    x = data["x"]
    H = params["w_enc"].shape[1]
    perm = jax.random.permutation(perm_key, x.shape[0])      # corruption perm

    (pos_poi_pad, neg_poi_pad, region_pad, neg_region_pad, city_pad) = \
        _hgi_device_forward(x, data["adj"], data["assign"], data["region_adj"],
                            data["area_row"], params["w_enc"], params["w_p2r"],
                            params["w_r2c"], perm)

    region_emb = region_pad[:, :H]
    neg_region_emb = neg_region_pad[:, :H]
    city_emb = city_pad[0, :H]
    del neg_poi_pad  # negative POI embeddings are consumed via neg_region_emb

    # ---- hard negative sampling: host-side python `random` decisions (like the
    #      reference); embedding gathers stay on device over the padded array,
    #      with the lane strip-slice deferred to this final consumer.
    region_id = np.asarray(data["region_id"])                 # host ints
    sim = np.asarray(data["coarse_region_similarity"])        # host floats
    num_regions = int(region_id.max()) + 1
    all_region_ids = set(region_id.tolist())

    pos_poi_emb_list = []
    neg_poi_emb_list = []
    for region in range(num_regions):
        ids_in_region = np.nonzero(region_id == region)[0]
        if py_rng.random() < 0.25:
            hard_range = np.nonzero((sim[region] > 0.6) & (sim[region] < 0.8))[0]
            if hard_range.shape[0] > 0:
                another_region_id = py_rng.sample(hard_range.tolist(), 1)[0]
            else:
                another_region_id = py_rng.sample(sorted(all_region_ids - {region}), 1)[0]
        else:
            another_region_id = py_rng.sample(sorted(all_region_ids - {region}), 1)[0]
        ids_in_other = np.nonzero(region_id == another_region_id)[0]
        pos_poi_emb_list.append(
            jnp.take(pos_poi_pad, jnp.asarray(ids_in_region, dtype=jnp.int32),
                     axis=0)[:, :H].astype(jnp.float32))
        neg_poi_emb_list.append(
            jnp.take(pos_poi_pad, jnp.asarray(ids_in_other, dtype=jnp.int32),
                     axis=0)[:, :H].astype(jnp.float32))

    return pos_poi_emb_list, neg_poi_emb_list, region_emb, neg_region_emb, city_emb


# ------------------------------- setup glue ---------------------------------- #

def _uniform(key, shape, bound):
    return jax.random.uniform(key, shape, jnp.float32, minval=-bound, maxval=bound)


def build_params(key, in_features, hidden):
    ks = jax.random.split(key, 5)
    b_in = 1.0 / np.sqrt(in_features)
    b_h = 1.0 / np.sqrt(hidden)
    return {
        "w_enc": _uniform(ks[0], (in_features, hidden), b_in),
        "w_p2r": _uniform(ks[1], (hidden, hidden), b_h),
        "w_r2c": _uniform(ks[2], (hidden, hidden), b_h),
        # discriminator weights from the reference __init__ (unused in forward)
        "weight_poi2region": _uniform(ks[3], (hidden, hidden), b_h),
        "weight_region2city": _uniform(ks[4], (hidden, hidden), b_h),
    }


def build_data(key, num_pois, in_features, num_regions):
    ks = jax.random.split(key, 5)
    x = jax.random.normal(ks[0], (num_pois, in_features), jnp.float32)

    # row-normalized POI adjacency with self loops (dense, synthetic)
    a = (jax.random.uniform(ks[1], (num_pois, num_pois)) > 0.8).astype(jnp.float32)
    a = jnp.maximum(a, a.T) + jnp.eye(num_pois, dtype=jnp.float32)
    a = a / jnp.sum(a, axis=1, keepdims=True)

    # region assignment (mean pooling matrix)
    region_id = jax.random.randint(ks[2], (num_pois,), 0, num_regions)
    onehot = (region_id[:, None] == jnp.arange(num_regions)[None, :]).astype(jnp.float32)
    counts = jnp.maximum(jnp.sum(onehot, axis=0), 1.0)
    assign = (onehot / counts[None, :]).T            # [R, N]

    # region adjacency (row-normalized, with self loops)
    ra = (jax.random.uniform(ks[3], (num_regions, num_regions)) > 0.5).astype(jnp.float32)
    ra = jnp.maximum(ra, ra.T) + jnp.eye(num_regions, dtype=jnp.float32)
    ra = ra / jnp.sum(ra, axis=1, keepdims=True)

    area = jax.random.uniform(ks[4], (num_regions,), jnp.float32, minval=0.5, maxval=2.0)
    area_row = (area / jnp.sum(area))[None, :]       # [1, R]

    sim = jax.random.uniform(jax.random.fold_in(key, 7), (num_regions, num_regions))

    return {
        "x": x,
        "adj": a,
        "region_id": np.asarray(region_id),                     # host-side labels
        "assign": assign,
        "region_adj": ra,
        "area_row": area_row,
        "coarse_region_similarity": np.asarray(sim),            # host-side sims
    }


if __name__ == "__main__":
    NUM_POIS = 32
    IN_FEATURES = 16
    HIDDEN = 32
    NUM_REGIONS = 8

    root = jax.random.PRNGKey(0)
    k_params, k_data, k_perm = jax.random.split(root, 3)

    params = build_params(k_params, IN_FEATURES, HIDDEN)
    data = build_data(k_data, NUM_POIS, IN_FEATURES, NUM_REGIONS)
    py_rng = random.Random(0)  # deterministic stand-in for python `random`

    (pos_list, neg_list, region_emb, neg_region_emb, city_emb) = hgi_forward(
        params, data, k_perm, py_rng)

    jax.block_until_ready(region_emb)
    jax.block_until_ready(neg_region_emb)
    jax.block_until_ready(city_emb)
    for t in pos_list + neg_list:
        jax.block_until_ready(t)

    assert region_emb.shape == (NUM_REGIONS, HIDDEN)
    assert neg_region_emb.shape == (NUM_REGIONS, HIDDEN)
    assert city_emb.shape == (HIDDEN,)
    assert len(pos_list) == NUM_REGIONS and len(neg_list) == NUM_REGIONS
    assert all(t.shape[1] == HIDDEN for t in pos_list if t.shape[0] > 0)

    print("KERNEL_OK")
</pallas_src>

<mosaic_0001>
module attributes {stable_mosaic.version = 11 : i64} {
  func.func @_hgi_fused_kernel(%arg0: memref<32x32xbf16, #tpu.memory_space<vmem>>, %arg1: memref<32x256xbf16, #tpu.memory_space<vmem>>, %arg2: memref<8x32xbf16, #tpu.memory_space<vmem>>, %arg3: memref<8x8xbf16, #tpu.memory_space<vmem>>, %arg4: memref<8x128xf32, #tpu.memory_space<vmem>>, %arg5: memref<128x128xbf16, #tpu.memory_space<vmem>>, %arg6: memref<128x128xbf16, #tpu.memory_space<vmem>>, %arg7: memref<128x128xbf16, #tpu.memory_space<vmem>>, %arg8: memref<32x128xbf16, #tpu.memory_space<vmem>>, %arg9: memref<32x128xbf16, #tpu.memory_space<vmem>>, %arg10: memref<8x128xf32, #tpu.memory_space<vmem>>, %arg11: memref<8x128xf32, #tpu.memory_space<vmem>>, %arg12: memref<1x128xf32, #tpu.memory_space<vmem>>) attributes {dimension_semantics = [], scalar_prefetch = 0 : i64, scratch_operands = 0 : i64, tpu.core_type = #tpu.core_type<tc>} {
    %c0 = arith.constant 0 : index
    %c0_0 = arith.constant 0 : index
    %0 = vector.load %arg0[%c0, %c0_0] : memref<32x32xbf16, #tpu.memory_space<vmem>>, vector<32x32xbf16>
    %c0_1 = arith.constant 0 : index
    %c0_2 = arith.constant 0 : index
    %1 = vector.load %arg1[%c0_1, %c0_2] : memref<32x256xbf16, #tpu.memory_space<vmem>>, vector<32x256xbf16>
    %cst = arith.constant dense<0.000000e+00> : vector<32x256xf32>
    %2 = tpu.matmul %0, %1, %cst {dimension_numbers = #tpu.dot_dimension_numbers<[1], [0], [0], [1], [0, 0, 1, 1], [], []>} : vector<32x32xbf16>, vector<32x256xbf16>, vector<32x256xf32> -> vector<32x256xf32>
    %3 = vector.extract_strided_slice %2 {offsets = [0, 0], sizes = [32, 128], strides = [1, 1]} : vector<32x256xf32> to vector<32x128xf32>
    %4 = vector.extract_strided_slice %2 {offsets = [0, 128], sizes = [32, 128], strides = [1, 1]} : vector<32x256xf32> to vector<32x128xf32>
    %5 = tpu.concatenate %3, %4 in 0 : vector<32x128xf32>, vector<32x128xf32> -> vector<64x128xf32>
    %6 = arith.truncf %5 : vector<64x128xf32> to vector<64x128xbf16>
    %c0_3 = arith.constant 0 : index
    %c0_4 = arith.constant 0 : index
    %7 = vector.load %arg5[%c0_3, %c0_4] : memref<128x128xbf16, #tpu.memory_space<vmem>>, vector<128x128xbf16>
    %cst_5 = arith.constant dense<0.000000e+00> : vector<64x128xf32>
    %8 = tpu.matmul %6, %7, %cst_5 {dimension_numbers = #tpu.dot_dimension_numbers<[1], [0], [0], [1], [0, 0, 1, 1], [], []>} : vector<64x128xbf16>, vector<128x128xbf16>, vector<64x128xf32> -> vector<64x128xf32>
    %cst_6 = arith.constant 0.000000e+00 : f32
    %9 = vector.broadcast %cst_6 : f32 to vector<64x128xf32>
    %10 = arith.maximumf %8, %9 : vector<64x128xf32>
    %11 = vector.extract_strided_slice %10 {offsets = [0, 0], sizes = [32, 128], strides = [1, 1]} : vector<64x128xf32> to vector<32x128xf32>
    %12 = vector.extract_strided_slice %10 {offsets = [32, 0], sizes = [32, 128], strides = [1, 1]} : vector<64x128xf32> to vector<32x128xf32>
    %13 = arith.truncf %11 : vector<32x128xf32> to vector<32x128xbf16>
    %c0_7 = arith.constant 0 : index
    %c0_8 = arith.constant 0 : index
    %14 = vector.load %arg8[%c0_7, %c0_8] : memref<32x128xbf16, #tpu.memory_space<vmem>>, vector<32x128xbf16>
    tpu.vector_store %arg8[%c0_7, %c0_8], %13 {strides = array<i32>} : memref<32x128xbf16, #tpu.memory_space<vmem>>, vector<32x128xbf16>,
    %15 = arith.truncf %12 : vector<32x128xf32> to vector<32x128xbf16>
    %c0_9 = arith.constant 0 : index
    %c0_10 = arith.constant 0 : index
    %16 = vector.load %arg9[%c0_9, %c0_10] : memref<32x128xbf16, #tpu.memory_space<vmem>>, vector<32x128xbf16>
    tpu.vector_store %arg9[%c0_9, %c0_10], %15 {strides = array<i32>} : memref<32x128xbf16, #tpu.memory_space<vmem>>, vector<32x128xbf16>,
    %17 = tpu.concatenate %11, %12 in 1 : vector<32x128xf32>, vector<32x128xf32> -> vector<32x256xf32>
    %18 = arith.truncf %17 : vector<32x256xf32> to vector<32x256xbf16>
    %c0_11 = arith.constant 0 : index
    %c0_12 = arith.constant 0 : index
    %19 = vector.load %arg2[%c0_11, %c0_12] : memref<8x32xbf16, #tpu.memory_space<vmem>>, vector<8x32xbf16>
    %cst_13 = arith.constant dense<0.000000e+00> : vector<8x256xf32>
    %20 = tpu.matmul %19, %18, %cst_13 {dimension_numbers = #tpu.dot_dimension_numbers<[1], [0], [0], [1], [0, 0, 1, 1], [], []>} : vector<8x32xbf16>, vector<32x256xbf16>, vector<8x256xf32> -> vector<8x256xf32>
    %c0_14 = arith.constant 0 : index
    %c0_15 = arith.constant 0 : index
    %21 = vector.load %arg3[%c0_14, %c0_15] : memref<8x8xbf16, #tpu.memory_space<vmem>>, vector<8x8xbf16>
    %22 = arith.truncf %20 : vector<8x256xf32> to vector<8x256xbf16>
    %cst_16 = arith.constant dense<0.000000e+00> : vector<8x256xf32>
    %23 = tpu.matmul %21, %22, %cst_16 {dimension_numbers = #tpu.dot_dimension_numbers<[1], [0], [0], [1], [0, 0, 1, 1], [], []>} : vector<8x8xbf16>, vector<8x256xbf16>, vector<8x256xf32> -> vector<8x256xf32>
    %24 = vector.extract_strided_slice %23 {offsets = [0, 0], sizes = [8, 128], strides = [1, 1]} : vector<8x256xf32> to vector<8x128xf32>
    %25 = vector.extract_strided_slice %23 {offsets = [0, 128], sizes = [8, 128], strides = [1, 1]} : vector<8x256xf32> to vector<8x128xf32>
    %26 = tpu.concatenate %24, %25 in 0 : vector<8x128xf32>, vector<8x128xf32> -> vector<16x128xf32>
    %27 = arith.truncf %26 : vector<16x128xf32> to vector<16x128xbf16>
    %c0_17 = arith.constant 0 : index
    %c0_18 = arith.constant 0 : index
    %28 = vector.load %arg6[%c0_17, %c0_18] : memref<128x128xbf16, #tpu.memory_space<vmem>>, vector<128x128xbf16>
    %cst_19 = arith.constant dense<0.000000e+00> : vector<16x128xf32>
    %29 = tpu.matmul %27, %28, %cst_19 {dimension_numbers = #tpu.dot_dimension_numbers<[1], [0], [0], [1], [0, 0, 1, 1], [], []>} : vector<16x128xbf16>, vector<128x128xbf16>, vector<16x128xf32> -> vector<16x128xf32>
    %cst_20 = arith.constant 0.000000e+00 : f32
    %30 = vector.broadcast %cst_20 : f32 to vector<16x128xf32>
    %31 = arith.maximumf %29, %30 : vector<16x128xf32>
    %32 = vector.extract_strided_slice %31 {offsets = [0, 0], sizes = [8, 128], strides = [1, 1]} : vector<16x128xf32> to vector<8x128xf32>
    %33 = vector.extract_strided_slice %31 {offsets = [8, 0], sizes = [8, 128], strides = [1, 1]} : vector<16x128xf32> to vector<8x128xf32>
    %c0_21 = arith.constant 0 : index
    %c0_22 = arith.constant 0 : index
    %34 = vector.load %arg10[%c0_21, %c0_22] : memref<8x128xf32, #tpu.memory_space<vmem>>, vector<8x128xf32>
    tpu.vector_store %arg10[%c0_21, %c0_22], %32 {strides = array<i32>} : memref<8x128xf32, #tpu.memory_space<vmem>>, vector<8x128xf32>,
    %c0_23 = arith.constant 0 : index
    %c0_24 = arith.constant 0 : index
    %35 = vector.load %arg11[%c0_23, %c0_24] : memref<8x128xf32, #tpu.memory_space<vmem>>, vector<8x128xf32>
    tpu.vector_store %arg11[%c0_23, %c0_24], %33 {strides = array<i32>} : memref<8x128xf32, #tpu.memory_space<vmem>>, vector<8x128xf32>,
    %c0_25 = arith.constant 0 : index
    %c0_26 = arith.constant 0 : index
    %36 = vector.load %arg4[%c0_25, %c0_26] : memref<8x128xf32, #tpu.memory_space<vmem>>, vector<8x128xf32>
    %37 = arith.mulf %36, %32 : vector<8x128xf32>
    %cst_27 = arith.constant dense<0.000000e+00> : vector<128xf32>
    %38 = vector.multi_reduction <add>, %37, %cst_27 [0] : vector<8x128xf32> to vector<128xf32>
    %39 = vector.shape_cast %38 : vector<128xf32> to vector<1x128xf32>
    %40 = arith.truncf %39 : vector<1x128xf32> to vector<1x128xbf16>
    %c0_28 = arith.constant 0 : index
    %c0_29 = arith.constant 0 : index
    %41 = vector.load %arg7[%c0_28, %c0_29] : memref<128x128xbf16, #tpu.memory_space<vmem>>, vector<128x128xbf16>
    %cst_30 = arith.constant dense<0.000000e+00> : vector<1x128xf32>
    %42 = tpu.matmul %40, %41, %cst_30 {dimension_numbers = #tpu.dot_dimension_numbers<[1], [0], [0], [1], [0, 0, 1, 1], [], []>} : vector<1x128xbf16>, vector<128x128xbf16>, vector<1x128xf32> -> vector<1x128xf32>
    %43 = math.tanh %42 : vector<1x128xf32>
    %c0_31 = arith.constant 0 : index
    %c0_32 = arith.constant 0 : index
    %44 = vector.load %arg12[%c0_31, %c0_32] : memref<1x128xf32, #tpu.memory_space<vmem>>, vector<1x128xf32>
    tpu.vector_store %arg12[%c0_31, %c0_32], %43 {strides = array<i32>} : memref<1x128xf32, #tpu.memory_space<vmem>>, vector<1x128xf32>,
    return
  }
}

</mosaic_0001>

<llo_original>
// kernel: _hgi_device_forward.1
$region0: #{_hgi_device_forward.1}
  #allocation0 [shape = 'u32[]', space=smem, size = 0x4, offset = 0x4, fixed_abs, tag = 'smem constant byte address 0x4 - core index']
  #allocation1 [shape = 'u32[144,128]{1,0:T(1,128)}', space=vmem, size = 0x12000, scoped, tag = 'internal scratch']
  %s0 = inlined_call_operand.vmem [shape: bf16[32,32], index: 0, kind: input, shape index: {}]
  %s1 = inlined_call_operand.vmem [shape: bf16[32,256], index: 1, kind: input, shape index: {}]
  %s2 = inlined_call_operand.vmem [shape: bf16[8,32], index: 2, kind: input, shape index: {}]
  %s3 = inlined_call_operand.vmem [shape: bf16[8,8], index: 3, kind: input, shape index: {}]
  %s4 = inlined_call_operand.vmem [shape: f32[8,128], index: 4, kind: input, shape index: {}]
  %s5 = inlined_call_operand.vmem [shape: bf16[128,128], index: 5, kind: input, shape index: {}]
  %s6 = inlined_call_operand.vmem [shape: bf16[128,128], index: 6, kind: input, shape index: {}]
  %s7 = inlined_call_operand.vmem [shape: bf16[128,128], index: 7, kind: input, shape index: {}]
  %s8 = inlined_call_operand.hbm [shape: bf16[32,128], index: 8, kind: output, shape index: {0}]
  %s9 = inlined_call_operand.hbm [shape: bf16[32,128], index: 9, kind: output, shape index: {1}]
  %s10 = inlined_call_operand.hbm [shape: f32[8,128], index: 10, kind: output, shape index: {2}]
  %s11 = inlined_call_operand.hbm [shape: f32[8,128], index: 11, kind: output, shape index: {3}]
  %s12 = inlined_call_operand.hbm [shape: f32[1,128], index: 12, kind: output, shape index: {4}]
  %13 = xla_tuple %s8, %s9, %s10, %s11, %s12
  %s14 = sld [smem:[#allocation0]]
  $region74: #{_hgi_device_forward.1} parent=0
    _
  %s16 = ssub.s32 1, %s14
  %s17 = scalar_select 0, %s16, %s14
  $region1: #{_hgi_device_forward.1} parent=0
    #allocation2 [shape = 'u8[8192]{0}', space=vmem, size = 0x2000, scoped, tag = 'output window, operand 0, single buffered']
    #allocation3 [shape = 's32[1]{0}', space=sflag, size = 0x4, scoped, tag = 'scoped memory for _hgi_device_forward.1']
    #allocation4 [shape = 'u8[8192]{0}', space=vmem, size = 0x2000, scoped, tag = 'output window, operand 1, single buffered']
    #allocation5 [shape = 's32[1]{0}', space=sflag, size = 0x4, scoped, tag = 'scoped memory for _hgi_device_forward.1']
    #allocation6 [shape = 'u8[4096]{0}', space=vmem, size = 0x1000, scoped, tag = 'output window, operand 2, single buffered']
    #allocation7 [shape = 'u8[4096]{0}', space=vmem, size = 0x1000, scoped, tag = 'output window, operand 3, single buffered']
    #allocation8 [shape = 's32[1]{0}', space=sflag, size = 0x4, scoped, tag = 'scoped memory for _hgi_device_forward.1']
    #allocation9 [shape = 'u8[512]{0}', space=vmem, size = 0x400, scoped, tag = 'output window, operand 4, single buffered']
    %18 = vsyncpa [#allocation3], 0
    %19 = vsyncpa [#allocation5], 0
    %20 = vsyncpa [#allocation8], 0
    // Predicated region
    $region2: #{_hgi_device_forward.1} parent=1 // pred_check
      _
    $region3: #{_hgi_device_forward.1} parent=1 // pred_check_branch
      %22 = sbr.rel (0) target = $region5
    $region4: #{_hgi_device_forward.1} parent=1 // pred_region
      _
    $region5: #{_hgi_device_forward.1} parent=1 // pred_fallthru
      _
    // Predicated region
    $region6: #{_hgi_device_forward.1} parent=1 // pred_check
      _
    $region7: #{_hgi_device_forward.1} parent=1 // pred_check_branch
      %24 = sbr.rel (0) target = $region9
    $region8: #{_hgi_device_forward.1} parent=1 // pred_region
      _
    $region9: #{_hgi_device_forward.1} parent=1 // pred_fallthru
      _
    // Predicated region
    $region10: #{_hgi_device_forward.1} parent=1 // pred_check
      _
    $region11: #{_hgi_device_forward.1} parent=1 // pred_check_branch
      %26 = sbr.rel (0) target = $region13
    $region12: #{_hgi_device_forward.1} parent=1 // pred_region
      _
    $region13: #{_hgi_device_forward.1} parent=1 // pred_fallthru
      _
    // Predicated region
    $region14: #{_hgi_device_forward.1} parent=1 // pred_check
      _
    $region15: #{_hgi_device_forward.1} parent=1 // pred_check_branch
      %28 = sbr.rel (0) target = $region17
    $region16: #{_hgi_device_forward.1} parent=1 // pred_region
      _
    $region17: #{_hgi_device_forward.1} parent=1 // pred_fallthru
      _
    // Predicated region
    $region18: #{_hgi_device_forward.1} parent=1 // pred_check
      _
    $region19: #{_hgi_device_forward.1} parent=1 // pred_check_branch
      %30 = sbr.rel (0) target = $region21
    $region20: #{_hgi_device_forward.1} parent=1 // pred_region
      _
    $region21: #{_hgi_device_forward.1} parent=1 // pred_fallthru
      _
    // Predicated region
    $region22: #{_hgi_device_forward.1} parent=1 // pred_check
      _
    $region23: #{_hgi_device_forward.1} parent=1 // pred_check_branch
      %32 = sbr.rel (0) target = $region25
    $region24: #{_hgi_device_forward.1} parent=1 // pred_region
      _
    $region25: #{_hgi_device_forward.1} parent=1 // pred_fallthru
      _
    // Predicated region
    $region26: #{_hgi_device_forward.1} parent=1 // pred_check
      _
    $region27: #{_hgi_device_forward.1} parent=1 // pred_check_branch
      %34 = sbr.rel (0) target = $region29
    $region28: #{_hgi_device_forward.1} parent=1 // pred_region
      _
    $region29: #{_hgi_device_forward.1} parent=1 // pred_fallthru
      _
    // Predicated region
    $region30: #{_hgi_device_forward.1} parent=1 // pred_check
      _
    $region31: #{_hgi_device_forward.1} parent=1 // pred_check_branch
      %36 = sbr.rel (0) target = $region33
    $region32: #{_hgi_device_forward.1} parent=1 // pred_region
      _
    $region33: #{_hgi_device_forward.1} parent=1 // pred_fallthru
      _
    %v38 = vld [vmem:[%s0] sm:$0xf]
    %v39 = vld [vmem:[%s0 + $0x4] sm:$0xf]
    %v40 = vld [vmem:[%s0 + $0x8] sm:$0xf]
    %v41 = vld [vmem:[%s0 + $0xc] sm:$0xf]
    %v42 = vld [vmem:[%s1] sm:$0xff]
    %v43 = vld [vmem:[%s1 + $0x8] sm:$0xff]
    %v44 = vld [vmem:[%s1 + $0x10] sm:$0xff]
    %v45 = vld [vmem:[%s1 + $0x18] sm:$0xff]
    %v50 = vunpack.c.l.b16 %v38
    %v51 = vunpack.c.l.b16 %v39
    %v52 = vunpack.c.l.b16 %v40
    %v53 = vunpack.c.l.b16 %v41
    %v54 = vpack.c.b16 %v51, %v50
    %v55 = vpack.c.b16 %v53, %v52
    %v60 = vunpack.c.l.b16 %v42
    %v61 = vunpack.c.h.b16 %v42
    %v62 = vunpack.c.l.b16 %v43
    %v63 = vunpack.c.h.b16 %v43
    %v64 = vunpack.c.l.b16 %v44
    %v65 = vunpack.c.h.b16 %v44
    %v66 = vunpack.c.l.b16 %v45
    %v67 = vunpack.c.h.b16 %v45
    %v68 = vpack.c.b16 %v62, %v60
    %v69 = vpack.c.b16 %v63, %v61
    %v70 = vpack.c.b16 %v66, %v64
    %v71 = vpack.c.b16 %v67, %v65
    %vm76 = vcmask 261120
    %v78 = vsel %vm76, %v54, 0
    %v81 = vsel %vm76, %v55, 0
    %83 = vmatprep.subr.bf16.mxu0 %v69
    %84 = vmatpush1.bf16.msra.mxu0 %v68
    %85 = vmatprep.subr.bf16.mxu0 %v71
    %86 = vmatpush1.bf16.msra.mxu0 %v70
    %87 = vmatprep.subr.bf16.mxu0 0
    %88 = vmatpush1.bf16.msra.mxu0 0
    %89 = vmatprep.subr.bf16.mxu0 0
    %90 = vmatpush1.bf16.msra.mxu0 0
    %91 = vmatprep.subr.bf16.mxu0 0
    %92 = vmatpush1.bf16.msra.mxu0 0
    %93 = vmatprep.subr.bf16.mxu0 0
    %94 = vmatpush1.bf16.msra.mxu0 0
    %95 = vmatprep.subr.bf16.mxu0 0
    %96 = vmatpush1.bf16.msra.mxu0 0
    %97 = vmatprep.subr.bf16.mxu0 0
    %98 = vmatpush1.bf16.msra.mxu0 0
    %99 = vmatprep.subr.bf16.mxu0 0
    %100 = vmatpush1.bf16.msra.mxu0 0
    %101 = vmatprep.subr.bf16.mxu0 0
    %102 = vmatpush1.bf16.msra.mxu0 0
    %103 = vmatprep.subr.bf16.mxu0 0
    %104 = vmatpush1.bf16.msra.mxu0 0
    %105 = vmatprep.subr.bf16.mxu0 0
    %106 = vmatpush1.bf16.msra.mxu0 0
    %107 = vmatprep.subr.bf16.mxu0 0
    %108 = vmatpush1.bf16.msra.mxu0 0
    %109 = vmatprep.subr.bf16.mxu0 0
    %110 = vmatpush1.bf16.msra.mxu0 0
    %111 = vmatprep.subr.bf16.mxu0 0
    %112 = vmatpush1.bf16.msra.mxu0 0
    %113 = vmatprep.subr.bf16.mxu0 0
    %114 = vmatpush1.bf16.msra.mxu0 0
    %115 = vmatprep.mubr.bf16.mxu0 0
    %116 = vmatmul.mubr.bf16.gmra.mrb[0].mxu0 %v78
    %v117 = vpop.f32.mrb[0].mxu0
    %v118 = vadd.f32 0.0, %v117
    %v119 = vpop.f32.mrb[0].mxu0
    %v120 = vadd.f32 0.0, %v119
    %v121 = vpop.f32.mrb[0].mxu0
    %v122 = vadd.f32 0.0, %v121
    %v123 = vpop.f32.mrb[0].mxu0
    %v124 = vadd.f32 0.0, %v123
    %125 = vmatprep.mubr.bf16.mxu0 0
    %126 = vmatmul.mubr.bf16.gmra.mrb[0].mxu0 %v81
    %v127 = vpop.f32.mrb[0].mxu0
    %v128 = vadd.f32 0.0, %v127
    %v129 = vpop.f32.mrb[0].mxu0
    %v130 = vadd.f32 0.0, %v129
    %v131 = vpop.f32.mrb[0].mxu0
    %v132 = vadd.f32 0.0, %v131
    %v133 = vpop.f32.mrb[0].mxu0
    %v134 = vadd.f32 0.0, %v133
    %135 = vdwg.mxu0
    %v136 = vpack.c.bf16 %v122, %v118
    %v137 = vpack.c.bf16 %v132, %v128
    %v138 = vpack.c.bf16 %v124, %v120
    %v139 = vpack.c.bf16 %v134, %v130
    %v140 = vld [vmem:[%s5] sm:$0xf]
    %v141 = vld [vmem:[%s5 + $0x4] sm:$0xf]
    %v142 = vld [vmem:[%s5 + $0x8] sm:$0xf]
    %v143 = vld [vmem:[%s5 + $0xc] sm:$0xf]
    %v144 = vld [vmem:[%s5 + $0x10] sm:$0xf]
    %v145 = vld [vmem:[%s5 + $0x14] sm:$0xf]
    %v146 = vld [vmem:[%s5 + $0x18] sm:$0xf]
    %v147 = vld [vmem:[%s5 + $0x1c] sm:$0xf]
    %v148 = vld [vmem:[%s5 + $0x20] sm:$0xf]
    %v149 = vld [vmem:[%s5 + $0x24] sm:$0xf]
    %v150 = vld [vmem:[%s5 + $0x28] sm:$0xf]
    %v151 = vld [vmem:[%s5 + $0x2c] sm:$0xf]
    %v152 = vld [vmem:[%s5 + $0x30] sm:$0xf]
    %v153 = vld [vmem:[%s5 + $0x34] sm:$0xf]
    %v154 = vld [vmem:[%s5 + $0x38] sm:$0xf]
    %v155 = vld [vmem:[%s5 + $0x3c] sm:$0xf]
    %v172 = vunpack.c.l.b16 %v140
    %v173 = vunpack.c.l.b16 %v141
    %v174 = vunpack.c.l.b16 %v142
    %v175 = vunpack.c.l.b16 %v143
    %v176 = vunpack.c.l.b16 %v144
    %v177 = vunpack.c.l.b16 %v145
    %v178 = vunpack.c.l.b16 %v146
    %v179 = vunpack.c.l.b16 %v147
    %v180 = vunpack.c.l.b16 %v148
    %v181 = vunpack.c.l.b16 %v149
    %v182 = vunpack.c.l.b16 %v150
    %v183 = vunpack.c.l.b16 %v151
    %v184 = vunpack.c.l.b16 %v152
    %v185 = vunpack.c.l.b16 %v153
    %v186 = vunpack.c.l.b16 %v154
    %v187 = vunpack.c.l.b16 %v155
    %v188 = vpack.c.b16 %v173, %v172
    %v189 = vpack.c.b16 %v175, %v174
    %v190 = vpack.c.b16 %v177, %v176
    %v191 = vpack.c.b16 %v179, %v178
    %v192 = vpack.c.b16 %v181, %v180
    %v193 = vpack.c.b16 %v183, %v182
    %v194 = vpack.c.b16 %v185, %v184
    %v195 = vpack.c.b16 %v187, %v186
    %204 = vmatprep.subr.bf16.mxu0 0
    %205 = vmatpush1.bf16.msra.mxu0 %v188
    %206 = vmatprep.subr.bf16.mxu0 0
    %207 = vmatpush1.bf16.msra.mxu0 %v189
    %208 = vmatprep.subr.bf16.mxu0 0
    %209 = vmatpush1.bf16.msra.mxu0 %v190
    %210 = vmatprep.subr.bf16.mxu0 0
    %211 = vmatpush1.bf16.msra.mxu0 %v191
    %212 = vmatprep.subr.bf16.mxu0 0
    %213 = vmatpush1.bf16.msra.mxu0 %v192
    %214 = vmatprep.subr.bf16.mxu0 0
    %215 = vmatpush1.bf16.msra.mxu0 %v193
    %216 = vmatprep.subr.bf16.mxu0 0
    %217 = vmatpush1.bf16.msra.mxu0 %v194
    %218 = vmatprep.subr.bf16.mxu0 0
    %219 = vmatpush1.bf16.msra.mxu0 %v195
    %220 = vmatprep.subr.bf16.mxu0 0
    %221 = vmatpush1.bf16.msra.mxu0 0
    %222 = vmatprep.subr.bf16.mxu0 0
    %223 = vmatpush1.bf16.msra.mxu0 0
    %224 = vmatprep.subr.bf16.mxu0 0
    %225 = vmatpush1.bf16.msra.mxu0 0
    %226 = vmatprep.subr.bf16.mxu0 0
    %227 = vmatpush1.bf16.msra.mxu0 0
    %228 = vmatprep.subr.bf16.mxu0 0
    %229 = vmatpush1.bf16.msra.mxu0 0
    %230 = vmatprep.subr.bf16.mxu0 0
    %231 = vmatpush1.bf16.msra.mxu0 0
    %232 = vmatprep.subr.bf16.mxu0 0
    %233 = vmatpush1.bf16.msra.mxu0 0
    %234 = vmatprep.subr.bf16.mxu0 0
    %235 = vmatpush1.bf16.msra.mxu0 0
    %236 = vmatprep.mubr.bf16.mxu0 0
    %237 = vmatmul.mubr.bf16.gmra.mrb[0].mxu0 %v136
    %v238 = vpop.f32.mrb[0].mxu0
    %v239 = vadd.f32 0.0, %v238
    %v240 = vpop.f32.mrb[0].mxu0
    %v241 = vpop.f32.mrb[0].mxu0
    %v242 = vadd.f32 0.0, %v241
    %v243 = vpop.f32.mrb[0].mxu0
    %244 = vmatprep.mubr.bf16.mxu0 0
    %245 = vmatmul.mubr.bf16.gmra.mrb[0].mxu0 %v137
    %v246 = vpop.f32.mrb[0].mxu0
    %v247 = vadd.f32 0.0, %v246
    %v248 = vpop.f32.mrb[0].mxu0
    %v249 = vpop.f32.mrb[0].mxu0
    %v250 = vadd.f32 0.0, %v249
    %v251 = vpop.f32.mrb[0].mxu0
    %252 = vmatprep.mubr.bf16.mxu0 0
    %253 = vmatmul.mubr.bf16.gmra.mrb[0].mxu0 %v138
    %v254 = vpop.f32.mrb[0].mxu0
    %v255 = vadd.f32 0.0, %v254
    %v256 = vpop.f32.mrb[0].mxu0
    %v257 = vpop.f32.mrb[0].mxu0
    %v258 = vadd.f32 0.0, %v257
    %v259 = vpop.f32.mrb[0].mxu0
    %260 = vmatprep.mubr.bf16.mxu0 0
    %261 = vmatmul.mubr.bf16.gmra.mrb[0].mxu0 %v139
    %v262 = vpop.f32.mrb[0].mxu0
    %v263 = vadd.f32 0.0, %v262
    %v264 = vpop.f32.mrb[0].mxu0
    %v265 = vpop.f32.mrb[0].mxu0
    %v266 = vadd.f32 0.0, %v265
    %v267 = vpop.f32.mrb[0].mxu0
    %268 = vdwg.mxu0
    %v269 = vmax.f32 %v239, 0.0
    %v270 = vmax.f32 %v242, 0.0
    %v271 = vmax.f32 %v247, 0.0
    %v272 = vmax.f32 %v250, 0.0
    %v273 = vmax.f32 %v255, 0.0
    %v274 = vmax.f32 %v258, 0.0
    %v275 = vmax.f32 %v263, 0.0
    %v276 = vmax.f32 %v266, 0.0
    %v277 = vpack.c.bf16 %v270, %v269
    %v278 = vpack.c.bf16 %v272, %v271
    %v281 = vunpack.c.l.b16 %v277
    %v282 = vunpack.c.h.b16 %v277
    %v283 = vunpack.c.l.b16 %v278
    %v284 = vunpack.c.h.b16 %v278
    %v285 = vpack.c.b16 %v281, %v281
    %v286 = vpack.c.b16 %v282, %v282
    %v287 = vpack.c.b16 %v283, %v283
    %v288 = vpack.c.b16 %v284, %v284
    %293 = vst [vmem:[#allocation2] sm:$0xf] %v285
    %294 = vst [vmem:[#allocation2 + $0x4] sm:$0xf] %v286
    %295 = vst [vmem:[#allocation2 + $0x8] sm:$0xf] %v287
    %296 = vst [vmem:[#allocation2 + $0xc] sm:$0xf] %v288
    %v297 = vpack.c.bf16 %v274, %v273
    %v298 = vpack.c.bf16 %v276, %v275
    %v301 = vunpack.c.l.b16 %v297
    %v302 = vunpack.c.h.b16 %v297
    %v303 = vunpack.c.l.b16 %v298
    %v304 = vunpack.c.h.b16 %v298
    %v305 = vpack.c.b16 %v301, %v301
    %v306 = vpack.c.b16 %v302, %v302
    %v307 = vpack.c.b16 %v303, %v303
    %v308 = vpack.c.b16 %v304, %v304
    %313 = vst [vmem:[#allocation4] sm:$0xf] %v305
    %314 = vst [vmem:[#allocation4 + $0x4] sm:$0xf] %v306
    %315 = vst [vmem:[#allocation4 + $0x8] sm:$0xf] %v307
    %316 = vst [vmem:[#allocation4 + $0xc] sm:$0xf] %v308
    %v317 = vld [vmem:[%s2] sm:$0xf]
    %v319 = vsel %vm76, %v317, 0
    %321 = vmatprep.subr.bf16.mxu0 %v297
    %322 = vmatpush1.bf16.msra.mxu0 %v277
    %323 = vmatprep.subr.bf16.mxu0 %v298
    %324 = vmatpush1.bf16.msra.mxu0 %v278
    %325 = vmatprep.subr.bf16.mxu0 0
    %326 = vmatpush1.bf16.msra.mxu0 0
    %327 = vmatprep.subr.bf16.mxu0 0
    %328 = vmatpush1.bf16.msra.mxu0 0
    %329 = vmatprep.subr.bf16.mxu0 0
    %330 = vmatpush1.bf16.msra.mxu0 0
    %331 = vmatprep.subr.bf16.mxu0 0
    %332 = vmatpush1.bf16.msra.mxu0 0
    %333 = vmatprep.subr.bf16.mxu0 0
    %334 = vmatpush1.bf16.msra.mxu0 0
    %335 = vmatprep.subr.bf16.mxu0 0
    %336 = vmatpush1.bf16.msra.mxu0 0
    %337 = vmatprep.subr.bf16.mxu0 0
    %338 = vmatpush1.bf16.msra.mxu0 0
    %339 = vmatprep.subr.bf16.mxu0 0
    %340 = vmatpush1.bf16.msra.mxu0 0
    %341 = vmatprep.subr.bf16.mxu0 0
    %342 = vmatpush1.bf16.msra.mxu0 0
    %343 = vmatprep.subr.bf16.mxu0 0
    %344 = vmatpush1.bf16.msra.mxu0 0
    %345 = vmatprep.subr.bf16.mxu0 0
    %346 = vmatpush1.bf16.msra.mxu0 0
    %347 = vmatprep.subr.bf16.mxu0 0
    %348 = vmatpush1.bf16.msra.mxu0 0
    %349 = vmatprep.subr.bf16.mxu0 0
    %350 = vmatpush1.bf16.msra.mxu0 0
    %351 = vmatprep.subr.bf16.mxu0 0
    %352 = vmatpush1.bf16.msra.mxu0 0
    %353 = vmatprep.mubr.bf16.mxu0 0
    %354 = vmatmul.mubr.bf16.gmra.mrb[0].mxu0 %v319
    %v355 = vpop.f32.mrb[0].mxu0
    %v356 = vadd.f32 0.0, %v355
    %v357 = vpop.f32.mrb[0].mxu0
    %v358 = vadd.f32 0.0, %v357
    %v359 = vpop.f32.mrb[0].mxu0
    %v360 = vpop.f32.mrb[0].mxu0
    %361 = vdwg.mxu0
    %v362 = vld [vmem:[%s3] sm:$0xf]
    %v363 = vpack.c.bf16 %v356, %v356
    %v364 = vpack.c.bf16 %v358, %v358
    %vm365 = vcmask 64512
    %v367 = vsel %vm365, %v362, 0
    %vm369 = vcmask 1043456
    %v371 = vsel %vm369, %v363, 0
    %v374 = vsel %vm369, %v364, 0
    %376 = vmatprep.subr.bf16.mxu0 %v374
    %377 = vmatpush1.bf16.msra.mxu0 %v371
    %378 = vmatprep.subr.bf16.mxu0 0
    %379 = vmatpush1.bf16.msra.mxu0 0
    %380 = vmatprep.subr.bf16.mxu0 0
    %381 = vmatpush1.bf16.msra.mxu0 0
    %382 = vmatprep.subr.bf16.mxu0 0
    %383 = vmatpush1.bf16.msra.mxu0 0
    %384 = vmatprep.subr.bf16.mxu0 0
    %385 = vmatpush1.bf16.msra.mxu0 0
    %386 = vmatprep.subr.bf16.mxu0 0
    %387 = vmatpush1.bf16.msra.mxu0 0
    %388 = vmatprep.subr.bf16.mxu0 0
    %389 = vmatpush1.bf16.msra.mxu0 0
    %390 = vmatprep.subr.bf16.mxu0 0
    %391 = vmatpush1.bf16.msra.mxu0 0
    %392 = vmatprep.subr.bf16.mxu0 0
    %393 = vmatpush1.bf16.msra.mxu0 0
    %394 = vmatprep.subr.bf16.mxu0 0
    %395 = vmatpush1.bf16.msra.mxu0 0
    %396 = vmatprep.subr.bf16.mxu0 0
    %397 = vmatpush1.bf16.msra.mxu0 0
    %398 = vmatprep.subr.bf16.mxu0 0
    %399 = vmatpush1.bf16.msra.mxu0 0
    %400 = vmatprep.subr.bf16.mxu0 0
    %401 = vmatpush1.bf16.msra.mxu0 0
    %402 = vmatprep.subr.bf16.mxu0 0
    %403 = vmatpush1.bf16.msra.mxu0 0
    %404 = vmatprep.subr.bf16.mxu0 0
    %405 = vmatpush1.bf16.msra.mxu0 0
    %406 = vmatprep.subr.bf16.mxu0 0
    %407 = vmatpush1.bf16.msra.mxu0 0
    %408 = vmatprep.mubr.bf16.mxu0 0
    %409 = vmatmul.mubr.bf16.gmra.mrb[0].mxu0 %v367
    %v410 = vpop.f32.mrb[0].mxu0
    %v411 = vadd.f32 0.0, %v410
    %v412 = vpop.f32.mrb[0].mxu0
    %v413 = vadd.f32 0.0, %v412
    %v414 = vpop.f32.mrb[0].mxu0
    %v415 = vpop.f32.mrb[0].mxu0
    %416 = vdwg.mxu0
    %v417 = vpack.c.bf16 %v413, %v411
    %v418 = vld [vmem:[%s6] sm:$0xf]
    %v419 = vld [vmem:[%s6 + $0x4] sm:$0xf]
    %v420 = vld [vmem:[%s6 + $0x8] sm:$0xf]
    %v421 = vld [vmem:[%s6 + $0xc] sm:$0xf]
    %v422 = vld [vmem:[%s6 + $0x10] sm:$0xf]
    %v423 = vld [vmem:[%s6 + $0x14] sm:$0xf]
    %v424 = vld [vmem:[%s6 + $0x18] sm:$0xf]
    %v425 = vld [vmem:[%s6 + $0x1c] sm:$0xf]
    %v426 = vld [vmem:[%s6 + $0x20] sm:$0xf]
    %v427 = vld [vmem:[%s6 + $0x24] sm:$0xf]
    %v428 = vld [vmem:[%s6 + $0x28] sm:$0xf]
    %v429 = vld [vmem:[%s6 + $0x2c] sm:$0xf]
    %v430 = vld [vmem:[%s6 + $0x30] sm:$0xf]
    %v431 = vld [vmem:[%s6 + $0x34] sm:$0xf]
    %v432 = vld [vmem:[%s6 + $0x38] sm:$0xf]
    %v433 = vld [vmem:[%s6 + $0x3c] sm:$0xf]
    %v450 = vunpack.c.l.b16 %v418
    %v451 = vunpack.c.l.b16 %v419
    %v452 = vunpack.c.l.b16 %v420
    %v453 = vunpack.c.l.b16 %v421
    %v454 = vunpack.c.l.b16 %v422
    %v455 = vunpack.c.l.b16 %v423
    %v456 = vunpack.c.l.b16 %v424
    %v457 = vunpack.c.l.b16 %v425
    %v458 = vunpack.c.l.b16 %v426
    %v459 = vunpack.c.l.b16 %v427
    %v460 = vunpack.c.l.b16 %v428
    %v461 = vunpack.c.l.b16 %v429
    %v462 = vunpack.c.l.b16 %v430
    %v463 = vunpack.c.l.b16 %v431
    %v464 = vunpack.c.l.b16 %v432
    %v465 = vunpack.c.l.b16 %v433
    %v466 = vpack.c.b16 %v451, %v450
    %v467 = vpack.c.b16 %v453, %v452
    %v468 = vpack.c.b16 %v455, %v454
    %v469 = vpack.c.b16 %v457, %v456
    %v470 = vpack.c.b16 %v459, %v458
    %v471 = vpack.c.b16 %v461, %v460
    %v472 = vpack.c.b16 %v463, %v462
    %v473 = vpack.c.b16 %v465, %v464
    %482 = vmatprep.subr.bf16.mxu0 0
    %483 = vmatpush1.bf16.msra.mxu0 %v466
    %484 = vmatprep.subr.bf16.mxu0 0
    %485 = vmatpush1.bf16.msra.mxu0 %v467
    %486 = vmatprep.subr.bf16.mxu0 0
    %487 = vmatpush1.bf16.msra.mxu0 %v468
    %488 = vmatprep.subr.bf16.mxu0 0
    %489 = vmatpush1.bf16.msra.mxu0 %v469
    %490 = vmatprep.subr.bf16.mxu0 0
    %491 = vmatpush1.bf16.msra.mxu0 %v470
    %492 = vmatprep.subr.bf16.mxu0 0
    %493 = vmatpush1.bf16.msra.mxu0 %v471
    %494 = vmatprep.subr.bf16.mxu0 0
    %495 = vmatpush1.bf16.msra.mxu0 %v472
    %496 = vmatprep.subr.bf16.mxu0 0
    %497 = vmatpush1.bf16.msra.mxu0 %v473
    %498 = vmatprep.subr.bf16.mxu0 0
    %499 = vmatpush1.bf16.msra.mxu0 0
    %500 = vmatprep.subr.bf16.mxu0 0
    %501 = vmatpush1.bf16.msra.mxu0 0
    %502 = vmatprep.subr.bf16.mxu0 0
    %503 = vmatpush1.bf16.msra.mxu0 0
    %504 = vmatprep.subr.bf16.mxu0 0
    %505 = vmatpush1.bf16.msra.mxu0 0
    %506 = vmatprep.subr.bf16.mxu0 0
    %507 = vmatpush1.bf16.msra.mxu0 0
    %508 = vmatprep.subr.bf16.mxu0 0
    %509 = vmatpush1.bf16.msra.mxu0 0
    %510 = vmatprep.subr.bf16.mxu0 0
    %511 = vmatpush1.bf16.msra.mxu0 0
    %512 = vmatprep.subr.bf16.mxu0 0
    %513 = vmatpush1.bf16.msra.mxu0 0
    %514 = vmatprep.mubr.bf16.mxu0 0
    %515 = vmatmul.mubr.bf16.gmra.mrb[0].mxu0 %v417
    %v516 = vpop.f32.mrb[0].mxu0
    %v517 = vadd.f32 0.0, %v516
    %v518 = vpop.f32.mrb[0].mxu0
    %v519 = vpop.f32.mrb[0].mxu0
    %v520 = vadd.f32 0.0, %v519
    %v521 = vpop.f32.mrb[0].mxu0
    %522 = vdwg.mxu0
    %v523 = vmax.f32 %v517, 0.0
    %v524 = vmax.f32 %v520, 0.0
    %525 = vst [vmem:[#allocation6] sm:$0xff] %v523
    %526 = vst [vmem:[#allocation7] sm:$0xff] %v524
    %v527 = vld [vmem:[%s4] sm:$0xff]
    %v528 = vmul.f32 %v527, %v523
    %v529 = vrot.slane %v528, 4
    %v530 = vadd.f32 %v528, %v529
    %v531 = vrot.slane %v530, 2
    %v532 = vadd.f32 %v530, %v531
    %v533 = vrot.slane %v532, 1
    %v534 = vadd.f32 %v532, %v533
    %v535 = vpack.c.bf16 %v534, %v534
    %v536 = vld [vmem:[%s7] sm:$0xf]
    %v537 = vld [vmem:[%s7 + $0x4] sm:$0xf]
    %v538 = vld [vmem:[%s7 + $0x8] sm:$0xf]
    %v539 = vld [vmem:[%s7 + $0xc] sm:$0xf]
    %v540 = vld [vmem:[%s7 + $0x10] sm:$0xf]
    %v541 = vld [vmem:[%s7 + $0x14] sm:$0xf]
    %v542 = vld [vmem:[%s7 + $0x18] sm:$0xf]
    %v543 = vld [vmem:[%s7 + $0x1c] sm:$0xf]
    %v544 = vld [vmem:[%s7 + $0x20] sm:$0xf]
    %v545 = vld [vmem:[%s7 + $0x24] sm:$0xf]
    %v546 = vld [vmem:[%s7 + $0x28] sm:$0xf]
    %v547 = vld [vmem:[%s7 + $0x2c] sm:$0xf]
    %v548 = vld [vmem:[%s7 + $0x30] sm:$0xf]
    %v549 = vld [vmem:[%s7 + $0x34] sm:$0xf]
    %v550 = vld [vmem:[%s7 + $0x38] sm:$0xf]
    %v551 = vld [vmem:[%s7 + $0x3c] sm:$0xf]
    %v568 = vunpack.c.l.b16 %v536
    %v569 = vunpack.c.l.b16 %v537
    %v570 = vunpack.c.l.b16 %v538
    %v571 = vunpack.c.l.b16 %v539
    %v572 = vunpack.c.l.b16 %v540
    %v573 = vunpack.c.l.b16 %v541
    %v574 = vunpack.c.l.b16 %v542
    %v575 = vunpack.c.l.b16 %v543
    %v576 = vunpack.c.l.b16 %v544
    %v577 = vunpack.c.l.b16 %v545
    %v578 = vunpack.c.l.b16 %v546
    %v579 = vunpack.c.l.b16 %v547
    %v580 = vunpack.c.l.b16 %v548
    %v581 = vunpack.c.l.b16 %v549
    %v582 = vunpack.c.l.b16 %v550
    %v583 = vunpack.c.l.b16 %v551
    %v584 = vpack.c.b16 %v569, %v568
    %v585 = vpack.c.b16 %v571, %v570
    %v586 = vpack.c.b16 %v573, %v572
    %v587 = vpack.c.b16 %v575, %v574
    %v588 = vpack.c.b16 %v577, %v576
    %v589 = vpack.c.b16 %v579, %v578
    %v590 = vpack.c.b16 %v581, %v580
    %v591 = vpack.c.b16 %v583, %v582
    %600 = vmatprep.subr.bf16.mxu0 0
    %601 = vmatpush1.bf16.msra.mxu0 %v584
    %602 = vmatprep.subr.bf16.mxu0 0
    %603 = vmatpush1.bf16.msra.mxu0 %v585
    %604 = vmatprep.subr.bf16.mxu0 0
    %605 = vmatpush1.bf16.msra.mxu0 %v586
    %606 = vmatprep.subr.bf16.mxu0 0
    %607 = vmatpush1.bf16.msra.mxu0 %v587
    %608 = vmatprep.subr.bf16.mxu0 0
    %609 = vmatpush1.bf16.msra.mxu0 %v588
    %610 = vmatprep.subr.bf16.mxu0 0
    %611 = vmatpush1.bf16.msra.mxu0 %v589
    %612 = vmatprep.subr.bf16.mxu0 0
    %613 = vmatpush1.bf16.msra.mxu0 %v590
    %614 = vmatprep.subr.bf16.mxu0 0
    %615 = vmatpush1.bf16.msra.mxu0 %v591
    %616 = vmatprep.subr.bf16.mxu0 0
    %617 = vmatpush1.bf16.msra.mxu0 0
    %618 = vmatprep.subr.bf16.mxu0 0
    %619 = vmatpush1.bf16.msra.mxu0 0
    %620 = vmatprep.subr.bf16.mxu0 0
    %621 = vmatpush1.bf16.msra.mxu0 0
    %622 = vmatprep.subr.bf16.mxu0 0
    %623 = vmatpush1.bf16.msra.mxu0 0
    %624 = vmatprep.subr.bf16.mxu0 0
    %625 = vmatpush1.bf16.msra.mxu0 0
    %626 = vmatprep.subr.bf16.mxu0 0
    %627 = vmatpush1.bf16.msra.mxu0 0
    %628 = vmatprep.subr.bf16.mxu0 0
    %629 = vmatpush1.bf16.msra.mxu0 0
    %630 = vmatprep.subr.bf16.mxu0 0
    %631 = vmatpush1.bf16.msra.mxu0 0
    %632 = vmatprep.mubr.bf16.mxu0 0
    %633 = vmatmul.mubr.bf16.gmra.mrb[0].mxu0 %v535
    %v634 = vpop.f32.mrb[0].mxu0
    %v635 = vadd.f32 0.0, %v634
    %v636 = vpop.f32.mrb[0].mxu0
    %v637 = vpop.f32.mrb[0].mxu0
    %v638 = vpop.f32.mrb[0].mxu0
    %639 = vdwg.mxu0
    %v640 = vtanh.pop %v635
    %641 = vst [vmem:[#allocation9] sm:$0x1] %v640
    // Predicated region
    $region34: #{_hgi_device_forward.1} parent=1 // pred_check
      _
    $region35: #{_hgi_device_forward.1} parent=1 // pred_check_branch
      %643 = sbr.rel (0) target = $region37
    $region36: #{_hgi_device_forward.1} parent=1 // pred_region
      %s645 = ssub.s32 256, 256
      %646 = vsyncadd [#allocation3], %s645
      %s647 = sshll.u32 [#allocation2], 4
      %s648 = int_to_ptr.vmem [resolvable:$true] %s647
      %653 = dma.vmem_to_hbm [thread:$0]  %s648, 256, %s8, [#allocation3], 64, 64, 4
    $region37: #{_hgi_device_forward.1} parent=1 // pred_fallthru
      _
    // Predicated region
    $region38: #{_hgi_device_forward.1} parent=1 // pred_check
      _
    $region39: #{_hgi_device_forward.1} parent=1 // pred_check_branch
      %655 = sbr.rel (0) target = $region41
    $region40: #{_hgi_device_forward.1} parent=1 // pred_region
      %s657 = ssub.s32 256, 256
      %658 = vsyncadd [#allocation5], %s657
      %s659 = sshll.u32 [#allocation4], 4
      %s660 = int_to_ptr.vmem [resolvable:$true] %s659
      %665 = dma.vmem_to_hbm [thread:$0]  %s660, 256, %s9, [#allocation5], 64, 64, 4
    $region41: #{_hgi_device_forward.1} parent=1 // pred_fallthru
      _
    // Predicated region
    $region42: #{_hgi_device_forward.1} parent=1 // pred_check
      _
    $region43: #{_hgi_device_forward.1} parent=1 // pred_check_branch
      %667 = sbr.rel (0) target = $region45
    $region44: #{_hgi_device_forward.1} parent=1 // pred_region
      %s669 = ssub.s32 128, 128
      %670 = vsyncadd [#allocation5], %s669
      %s672 = sshll.u32 [#allocation6], 4
      %s673 = int_to_ptr.vmem [resolvable:$true] %s672
      %675 = dma.vmem_to_hbm [thread:$0]  %s673, 128, %s10, [#allocation5]
    $region45: #{_hgi_device_forward.1} parent=1 // pred_fallthru
      _
    // Predicated region
    $region46: #{_hgi_device_forward.1} parent=1 // pred_check
      _
    $region47: #{_hgi_device_forward.1} parent=1 // pred_check_branch
      %677 = sbr.rel (0) target = $region49
    $region48: #{_hgi_device_forward.1} parent=1 // pred_region
      %s679 = ssub.s32 128, 128
      %680 = vsyncadd [#allocation8], %s679
      %s682 = sshll.u32 [#allocation7], 4
      %s683 = int_to_ptr.vmem [resolvable:$true] %s682
      %685 = dma.vmem_to_hbm [thread:$0]  %s683, 128, %s11, [#allocation8]
    $region49: #{_hgi_device_forward.1} parent=1 // pred_fallthru
      _
    // Predicated region
    $region50: #{_hgi_device_forward.1} parent=1 // pred_check
      _
    $region51: #{_hgi_device_forward.1} parent=1 // pred_check_branch
      %687 = sbr.rel (0) target = $region53
    $region52: #{_hgi_device_forward.1} parent=1 // pred_region
      %s689 = ssub.s32 16, 16
      %690 = vsyncadd [#allocation8], %s689
      %s692 = sshll.u32 [#allocation9], 4
      %s693 = int_to_ptr.vmem [resolvable:$true] %s692
      %695 = dma.vmem_to_hbm [thread:$0]  %s693, 16, %s12, [#allocation8]
    $region53: #{_hgi_device_forward.1} parent=1 // pred_fallthru
      _
    // Predicated region
    $region54: #{_hgi_device_forward.1} parent=1 // pred_check
      _
    $region55: #{_hgi_device_forward.1} parent=1 // pred_check_branch
      %697 = sbr.rel (0) target = $region57
    $region56: #{_hgi_device_forward.1} parent=1 // pred_region
      %698 = dma.done [#allocation3], 256
    $region57: #{_hgi_device_forward.1} parent=1 // pred_fallthru
      _
    // Predicated region
    $region58: #{_hgi_device_forward.1} parent=1 // pred_check
      _
    $region59: #{_hgi_device_forward.1} parent=1 // pred_check_branch
      %700 = sbr.rel (0) target = $region61
    $region60: #{_hgi_device_forward.1} parent=1 // pred_region
      %701 = dma.done [#allocation5], 256
    $region61: #{_hgi_device_forward.1} parent=1 // pred_fallthru
      _
    // Predicated region
    $region62: #{_hgi_device_forward.1} parent=1 // pred_check
      _
    $region63: #{_hgi_device_forward.1} parent=1 // pred_check_branch
      %703 = sbr.rel (0) target = $region65
    $region64: #{_hgi_device_forward.1} parent=1 // pred_region
      %704 = dma.done [#allocation5], 128
    $region65: #{_hgi_device_forward.1} parent=1 // pred_fallthru
      _
    // Predicated region
    $region66: #{_hgi_device_forward.1} parent=1 // pred_check
      _
    $region67: #{_hgi_device_forward.1} parent=1 // pred_check_branch
      %706 = sbr.rel (0) target = $region69
    $region68: #{_hgi_device_forward.1} parent=1 // pred_region
      %707 = dma.done [#allocation8], 128
    $region69: #{_hgi_device_forward.1} parent=1 // pred_fallthru
      _
    // Predicated region
    $region70: #{_hgi_device_forward.1} parent=1 // pred_check
      _
    $region71: #{_hgi_device_forward.1} parent=1 // pred_check_branch
      %709 = sbr.rel (0) target = $region73
    $region72: #{_hgi_device_forward.1} parent=1 // pred_region
      %710 = dma.done [#allocation8], 16
    $region73: #{_hgi_device_forward.1} parent=1 // pred_fallthru
      _
    %711 = vsyncpa [#allocation3], 1
    %712 = vsyncpa [#allocation5], 1
    %713 = vsyncpa [#allocation8], 1

</llo_original>
